<compile_context>
chip_gen: v6e
topology: v6e:2x2x1
jax: 0.10.0
libtpu: 0.0.40
codegen_flags: <defaults>
</compile_context>

<pallas_src>
import math
import functools

import jax
import jax.numpy as jnp
from jax.experimental import pallas as pl
from jax.experimental.pallas import tpu as pltpu


# ---------------------------------------------------------------------------
# Parameter / buffer setup (plain JAX) — mirrors PositionEncode.__init__
# ---------------------------------------------------------------------------
def make_positional_encoding(d_model: int, max_len: int = 5000) -> jnp.ndarray:
    """Returns pe of shape (max_len, d_model), float32."""
    position = jnp.arange(0, max_len, dtype=jnp.float32)[:, None]          # (L, 1)
    div_term = jnp.exp(
        jnp.arange(0, d_model, 2, dtype=jnp.float32) * (-math.log(10000.0) / d_model)
    )                                                                        # (D/2,)
    ang = position * div_term                                                # (L, D/2)
    pe = jnp.zeros((max_len, d_model), dtype=jnp.float32)
    pe = pe.at[:, 0::2].set(jnp.sin(ang))
    pe = pe.at[:, 1::2].set(jnp.cos(ang))
    return pe


# ---------------------------------------------------------------------------
# In-kernel counter-based PRNG helper (portable: plain integer jnp ops only)
# ---------------------------------------------------------------------------
def _hash_u32(x):
    """Cheap xorshift-multiply mix on uint32 (VPU-only, no EUP/XLU)."""
    x = x ^ (x >> 16)
    x = x * jnp.uint32(0x7FEB352D)
    x = x ^ (x >> 15)
    x = x * jnp.uint32(0x846CA68B)
    x = x ^ (x >> 16)
    return x


# ---------------------------------------------------------------------------
# Pallas kernels (hot path: broadcast add + optional dropout), tiled over S
# ---------------------------------------------------------------------------
def _posenc_eval_kernel(x_ref, pe_ref, o_ref):
    # x tile: (TS, B, D);  pe tile: (TS, 1, D) — jnp broadcasts over batch.
    y = x_ref[...].astype(jnp.float32) + pe_ref[...]
    o_ref[...] = y.astype(o_ref.dtype)


def _posenc_train_kernel(seed_ref, x_ref, pe_ref, o_ref, *, p: float):
    y = x_ref[...].astype(jnp.float32) + pe_ref[...]

    ts, b, d = o_ref.shape
    i = pl.program_id(0)

    # Globally-unique element counter (different per grid tile / TensorCore).
    s_idx = jax.lax.broadcasted_iota(jnp.int32, (ts, b, d), 0) + i * ts
    b_idx = jax.lax.broadcasted_iota(jnp.int32, (ts, b, d), 1)
    d_idx = jax.lax.broadcasted_iota(jnp.int32, (ts, b, d), 2)
    flat = (s_idx * b + b_idx) * d + d_idx

    seed_u = seed_ref[0].astype(jnp.uint32)
    ctr = flat.astype(jnp.uint32) + seed_u * jnp.uint32(0x9E3779B9)
    bits = _hash_u32(_hash_u32(ctr))                      # ~uniform uint32

    threshold = jnp.uint32(min(int(p * float(2 ** 32)), 2 ** 32 - 1))
    keep = bits >= threshold                              # P(keep) = 1 - p
    scale = jnp.float32(1.0 / (1.0 - p))
    o_ref[...] = jnp.where(keep, y * scale, jnp.float32(0.0)).astype(o_ref.dtype)


# ---------------------------------------------------------------------------
# Wrapper
# ---------------------------------------------------------------------------
def position_encode(x: jnp.ndarray,
                    pe_full: jnp.ndarray,
                    *,
                    training: bool = False,
                    p: float = 0.1,
                    seed: int = 0,
                    block_s: int | None = None) -> jnp.ndarray:
    """
    x:       (S, B, D) float
    pe_full: (max_len, D) float32 — positional-encoding buffer
    """
    S, B, D = x.shape
    pe = pe_full[:S][:, None, :]                           # (S, 1, D) glue slice

    # Tile over S; each x/out tile targets ~2 MiB so double-buffered
    # (x + out + pe) stays well under the scoped-VMEM default on every
    # generation (16 MiB on v5e, 32 MiB on v6e/v7x, 64 MiB physical on v7x)
    # while being large enough to sit near the HBM roofline.
    if block_s is None:
        itemsize = jnp.dtype(x.dtype).itemsize
        target_bytes = 2 * 1024 * 1024
        block_s = max(1, target_bytes // max(1, B * D * itemsize))
    ts = int(min(S, block_s))
    grid = (pl.cdiv(S, ts),)

    # NOTE: last two block dims are the full (B, D) — lane-dense as long as
    # d_model is a multiple of 128 (typical transformer sizes).
    # TODO(synk): for d_model < 128 a wrapper-side flatten of (B, D) into one
    # lane axis would avoid masked partial stores; not needed for the demo.

    compiler_params = None
    if jax.default_backend() == "tpu":
        compiler_params = pltpu.CompilerParams(
            dimension_semantics=("parallel",))             # megacore on v7x

    out_shape = jax.ShapeDtypeStruct((S, B, D), x.dtype)

    if not training:
        return pl.pallas_call(
            _posenc_eval_kernel,
            out_shape=out_shape,
            grid=grid,
            in_specs=[
                pl.BlockSpec((ts, B, D), lambda i: (i, 0, 0)),
                pl.BlockSpec((ts, 1, D), lambda i: (i, 0, 0)),
            ],
            out_specs=pl.BlockSpec((ts, B, D), lambda i: (i, 0, 0)),
            compiler_params=compiler_params,
        )(x, pe)

    # Training-mode dropout (statistically equivalent to nn.Dropout(p);
    # torch's RNG stream is not reproduced bit-for-bit).
    seed_arr = jnp.array([seed], dtype=jnp.int32)
    kernel = functools.partial(_posenc_train_kernel, p=float(p))
    grid_spec = pltpu.PrefetchScalarGridSpec(
        num_scalar_prefetch=1,
        grid=grid,
        in_specs=[
            pl.BlockSpec((ts, B, D), lambda i, seed_ref: (i, 0, 0)),
            pl.BlockSpec((ts, 1, D), lambda i, seed_ref: (i, 0, 0)),
        ],
        out_specs=pl.BlockSpec((ts, B, D), lambda i, seed_ref: (i, 0, 0)),
    )
    return pl.pallas_call(
        kernel,
        out_shape=out_shape,
        grid_spec=grid_spec,
        compiler_params=compiler_params,
    )(seed_arr, x, pe)


# ---------------------------------------------------------------------------
# Demo / check
# ---------------------------------------------------------------------------
if __name__ == "__main__":
    d_model = 32
    max_len = 64
    S, B = 8, 2  # seq_len, batch

    key = jax.random.PRNGKey(0)
    x = jax.random.normal(key, (S, B, d_model), dtype=jnp.float32)
    pe_full = make_positional_encoding(d_model, max_len)

    ref = x + pe_full[:S][:, None, :]

    # Eval mode (dropout = identity) — exercise the grid with 2 steps.
    out = jax.block_until_ready(position_encode(x, pe_full, training=False, block_s=4))
    assert out.shape == (S, B, d_model)
    assert jnp.allclose(out, ref, atol=1e-6), "eval mismatch vs reference (gridded)"

    # Eval mode with the default (auto) tile size as well.
    out2 = jax.block_until_ready(position_encode(x, pe_full, training=False))
    assert jnp.allclose(out2, ref, atol=1e-6), "eval mismatch vs reference (auto tile)"

    # Training mode: every element must be either 0 (dropped) or ref/(1-p).
    p = 0.1
    out_train = jax.block_until_ready(
        position_encode(x, pe_full, training=True, p=p, seed=123, block_s=4)
    )
    assert out_train.shape == (S, B, d_model)
    scaled = ref / (1.0 - p)
    ok = jnp.all((out_train == 0.0) | (jnp.abs(out_train - scaled) < 1e-4))
    assert bool(ok), "training output is not a scaled/masked version of the reference"

    print("KERNEL_OK")
</pallas_src>

<mosaic_0001>
module attributes {stable_mosaic.version = 11 : i64} {
  func.func @_posenc_eval_kernel(%arg0: i32, %arg1: memref<4x2x32xf32, #tpu.memory_space<vmem>>, %arg2: memref<4x1x32xf32, #tpu.memory_space<vmem>>, %arg3: memref<4x2x32xf32, #tpu.memory_space<vmem>>) attributes {dimension_semantics = [#tpu.dimension_semantics<arbitrary>], iteration_bounds = array<i64: 2>, scalar_prefetch = 0 : i64, scratch_operands = 0 : i64, tpu.core_type = #tpu.core_type<tc>, window_params = [{transform_indices = @transform_0, window_bounds = array<i64: 4, 2, 32>}, {transform_indices = @transform_1, window_bounds = array<i64: 4, 1, 32>}, {transform_indices = @transform_2, window_bounds = array<i64: 4, 2, 32>}]} {
    %c0 = arith.constant 0 : index
    %c0_0 = arith.constant 0 : index
    %c0_1 = arith.constant 0 : index
    %0 = vector.load %arg1[%c0, %c0_0, %c0_1] : memref<4x2x32xf32, #tpu.memory_space<vmem>>, vector<4x2x32xf32>
    %c0_2 = arith.constant 0 : index
    %c0_3 = arith.constant 0 : index
    %c0_4 = arith.constant 0 : index
    %1 = vector.load %arg2[%c0_2, %c0_3, %c0_4] : memref<4x1x32xf32, #tpu.memory_space<vmem>>, vector<4x1x32xf32>
    %2 = vector.broadcast %1 : vector<4x1x32xf32> to vector<4x2x32xf32>
    %3 = arith.addf %0, %2 : vector<4x2x32xf32>
    %c0_5 = arith.constant 0 : index
    %c0_6 = arith.constant 0 : index
    %c0_7 = arith.constant 0 : index
    %4 = vector.load %arg3[%c0_5, %c0_6, %c0_7] : memref<4x2x32xf32, #tpu.memory_space<vmem>>, vector<4x2x32xf32>
    tpu.vector_store %arg3[%c0_5, %c0_6, %c0_7], %3 {strides = array<i32>} : memref<4x2x32xf32, #tpu.memory_space<vmem>>, vector<4x2x32xf32>,
    return
  }
  func.func @transform_0(%arg0: i32) -> (i32, i32, i32) {
    %c0_i32 = arith.constant 0 : i32
    %c0_i32_0 = arith.constant 0 : i32
    %c0_i32_1 = arith.constant 0 : i32
    return %arg0, %c0_i32, %c0_i32_0 : i32, i32, i32
  }
  func.func @transform_1(%arg0: i32) -> (i32, i32, i32) {
    %c0_i32 = arith.constant 0 : i32
    %c0_i32_0 = arith.constant 0 : i32
    %c0_i32_1 = arith.constant 0 : i32
    return %arg0, %c0_i32, %c0_i32_0 : i32, i32, i32
  }
  func.func @transform_2(%arg0: i32) -> (i32, i32, i32) {
    %c0_i32 = arith.constant 0 : i32
    %c0_i32_0 = arith.constant 0 : i32
    %c0_i32_1 = arith.constant 0 : i32
    return %arg0, %c0_i32, %c0_i32_0 : i32, i32, i32
  }
}

</mosaic_0001>

<llo_original>
// kernel: tpu_custom_call.1
$region0: #{tpu_custom_call.1}
  #allocation0 [shape = 'u32[]', space=smem, size = 0x4, offset = 0x4, fixed_abs, tag = 'smem constant byte address 0x4 - core index']
  #allocation1 [shape = 'u32[144,128]{1,0:T(1,128)}', space=vmem, size = 0x12000, scoped, tag = 'internal scratch']
  %s0 = inlined_call_operand.hbm [shape: f32[8,2,32], index: 0, kind: input, shape index: {}]
  %s1 = inlined_call_operand.hbm [shape: f32[8,1,32], index: 1, kind: input, shape index: {}]
  %s2 = inlined_call_operand.hbm [shape: f32[8,2,32], index: 2, kind: output, shape index: {}]
  %s3 = sld [smem:[#allocation0]]
  $region49: #{tpu_custom_call.1} parent=0
    _
  %s5 = ssub.s32 1, %s3
  %s6 = scalar_select 0, %s5, %s3
  $region1: #{tpu_custom_call.1} parent=0
    #allocation2 [shape = 'u8[8192]{0}', space=vmem, size = 0x2000, scoped, tag = 'input window, operand 0']
    #allocation3 [shape = 's32[2]{0}', space=sflag, size = 0x8, scoped, tag = 'scoped memory for tpu_custom_call.1']
    #allocation4 [shape = 's32[2]{0}', space=sflag, size = 0x8, scoped, tag = 'scoped memory for tpu_custom_call.1']
    #allocation5 [shape = 'u8[4096]{0}', space=vmem, size = 0x1000, scoped, tag = 'input window, operand 1']
    #allocation6 [shape = 's32[2]{0}', space=sflag, size = 0x8, scoped, tag = 'scoped memory for tpu_custom_call.1']
    #allocation7 [shape = 'u8[8192]{0}', space=vmem, size = 0x2000, scoped, tag = 'output window, operand 0']
    %7 = vsyncpa [#allocation3], 0
    %s8 = scalar_lea.sflag [#allocation3], 1
    %9 = vsyncpa %s8, 0
    %10 = vsyncpa [#allocation6], 0
    %s11 = scalar_lea.sflag [#allocation6], 1
    %12 = vsyncpa %s11, 0
    %13 = vsyncpa [#allocation4], 0
    %s14 = scalar_lea.sflag [#allocation4], 1
    %15 = vsyncpa %s14, 0
    loop: start=0, step=1, limit=4
    $region2: #{tpu_custom_call.1} parent=1 // loop_pre_header
      _
    $region3: #{tpu_custom_call.1} parent=1 // loop_header
      %s17 = sphi 0, %s21
      %p18 = scmp.ge.s32.totalorder %s17, 4
      %s27 = sphi 0, %s29
      %s30 = sphi 0, %s27
      %s31 = sphi 0, %s30
      %s47 = sphi 0, %s31
      %s53 = sphi 0, %s55
      %s56 = sphi 0, %s53
      %s57 = sphi 0, %s56
      %s73 = sphi 0, %s57
      %s79 = sphi 0, %s81
      %s82 = sphi 0, %s79
      %s83 = sphi 0, %s82
      %s99 = sphi 0, %s83
    $region4: #{tpu_custom_call.1} parent=1 // loop_header_branch
      %20 = sbr.rel (%p18) target = $region8
    $region5: #{tpu_custom_call.1} parent=1 // loop_body
      %s22 = ssub.s32 %s17, 1
      %s23 = ssub.s32 %s17, 2
      %s24 = sadd.s32 %s17, 1
      %s25 = ssub.s32 %s17, %s24
      %p26 = scmp.eq.s32.totalorder %s25, 0
      %s28 = sadd.s32 %s27, 1
      %s29 = scalar_select %p26, %s27, %s28
      %p32 = pneg %p26
      %p33 = scmp.eq.s32.totalorder %s17, 1
      %p34 = por %p32, %p33
      %p35 = scmp.ne.s32.totalorder %s27, %s30
      %p36 = scmp.eq.s32.totalorder %s17, 0
      %p37 = por %p35, %p36
      %p38 = scmp.ne.s32.totalorder %s27, %s30
      %p39 = scmp.eq.s32.totalorder %s22, 1
      %p40 = por %p38, %p39
      %p41 = scmp.ne.s32.totalorder %s30, %s31
      %p42 = scmp.eq.s32.totalorder %s22, 0
      %p43 = por %p41, %p42
      %p44 = scmp.ne.s32.totalorder %s30, %s31
      %p45 = scmp.eq.s32.totalorder %s23, 1
      %p46 = por %p44, %p45
      %p48 = scmp.ne.s32.totalorder %s31, %s47
      %p49 = scmp.eq.s32.totalorder %s23, 0
      %p50 = por %p48, %p49
      %s51 = ssub.s32 %s17, %s24
      %p52 = scmp.eq.s32.totalorder %s51, 0
      %s54 = sadd.s32 %s53, 1
      %s55 = scalar_select %p52, %s53, %s54
      %p58 = pneg %p52
      %p59 = scmp.eq.s32.totalorder %s17, 1
      %p60 = por %p58, %p59
      %p61 = scmp.ne.s32.totalorder %s53, %s56
      %p62 = scmp.eq.s32.totalorder %s17, 0
      %p63 = por %p61, %p62
      %p64 = scmp.ne.s32.totalorder %s53, %s56
      %p65 = scmp.eq.s32.totalorder %s22, 1
      %p66 = por %p64, %p65
      %p67 = scmp.ne.s32.totalorder %s56, %s57
      %p68 = scmp.eq.s32.totalorder %s22, 0
      %p69 = por %p67, %p68
      %p70 = scmp.ne.s32.totalorder %s56, %s57
      %p71 = scmp.eq.s32.totalorder %s23, 1
      %p72 = por %p70, %p71
      %p74 = scmp.ne.s32.totalorder %s57, %s73
      %p75 = scmp.eq.s32.totalorder %s23, 0
      %p76 = por %p74, %p75
      %s77 = ssub.s32 %s17, %s24
      %p78 = scmp.eq.s32.totalorder %s77, 0
      %s80 = sadd.s32 %s79, 1
      %s81 = scalar_select %p78, %s79, %s80
      %p84 = pneg %p78
      %p85 = scmp.eq.s32.totalorder %s17, 1
      %p86 = por %p84, %p85
      %p87 = scmp.ne.s32.totalorder %s79, %s82
      %p88 = scmp.eq.s32.totalorder %s17, 0
      %p89 = por %p87, %p88
      %p90 = scmp.ne.s32.totalorder %s79, %s82
      %p91 = scmp.eq.s32.totalorder %s22, 1
      %p92 = por %p90, %p91
      %p93 = scmp.ne.s32.totalorder %s82, %s83
      %p94 = scmp.eq.s32.totalorder %s22, 0
      %p95 = por %p93, %p94
      %p96 = scmp.ne.s32.totalorder %s82, %s83
      %p97 = scmp.eq.s32.totalorder %s23, 1
      %p98 = por %p96, %p97
      %p100 = scmp.ne.s32.totalorder %s83, %s99
      %p101 = scmp.eq.s32.totalorder %s23, 0
      %p102 = por %p100, %p101
      %p103 = scmp.le.s32.totalorder 1, %s17
      %p104 = scmp.lt.s32.totalorder %s17, 3
      %p105 = pnand %p103, %p104
      %p106 = pneg %p105
      // Predicated region
      $region9: #{tpu_custom_call.1} parent=5 // pred_check
        _
      $region10: #{tpu_custom_call.1} parent=5 // pred_check_branch
        %108 = sbr.rel (%p105) target = $region12
      $region11: #{tpu_custom_call.1} parent=5 // pred_region
        %s109 = ssub.s32 %s17, 1
      $region12: #{tpu_custom_call.1} parent=5 // pred_fallthru
        _
      %p110 = scmp.lt.s32.totalorder %s17, 2
      // Predicated region
      $region13: #{tpu_custom_call.1} parent=5 // pred_check
        %p111 = pneg %p110
      $region14: #{tpu_custom_call.1} parent=5 // pred_check_branch
        %113 = sbr.rel (%p111) target = $region16
      $region15: #{tpu_custom_call.1} parent=5 // pred_region
        // Predicated region
        $region17: #{tpu_custom_call.1} parent=15 // pred_check
          %p114 = pneg %p37
        $region18: #{tpu_custom_call.1} parent=15 // pred_check_branch
          %116 = sbr.rel (%p114) target = $region20
        $region19: #{tpu_custom_call.1} parent=15 // pred_region
          %s117 = sand.u32 %s27, 1
          %s118 = scalar_lea.sflag [#allocation3], %s117
          %s119 = sand.u32 %s27, 1
          %s120 = smul.addr %s119, 8
          %s121 = scalar_lea.vmem [#allocation2], %s120
          %s122 = smul.u32 4, %s17
          %s124 = ssub.s32 128, 128
          %125 = vsyncadd %s118, %s124
          %s126 = smul.addr %s122, 32
          %s127 = scalar_lea.hbm %s0, %s126
          %s128 = sshll.u32 %s121, 4
          %s129 = int_to_ptr.vmem [resolvable:$true] %s128
          %134 = dma.hbm_to_vmem [thread:$0]  %s127, 128, %s129, %s118, 32, 32, 2
        $region20: #{tpu_custom_call.1} parent=15 // pred_fallthru
          _
        // Predicated region
        $region21: #{tpu_custom_call.1} parent=15 // pred_check
          %p135 = pneg %p63
        $region22: #{tpu_custom_call.1} parent=15 // pred_check_branch
          %137 = sbr.rel (%p135) target = $region24
        $region23: #{tpu_custom_call.1} parent=15 // pred_region
          %s138 = sand.u32 %s53, 1
          %s139 = scalar_lea.sflag [#allocation6], %s138
          %s140 = sand.u32 %s53, 1
          %s141 = smul.addr %s140, 4
          %s142 = scalar_lea.vmem [#allocation5], %s141
          %s143 = smul.u32 4, %s17
          %s145 = ssub.s32 64, 64
          %146 = vsyncadd %s139, %s145
          %s147 = smul.addr %s143, 16
          %s148 = scalar_lea.hbm %s1, %s147
          %s149 = sshll.u32 %s142, 4
          %s150 = int_to_ptr.vmem [resolvable:$true] %s149
          %155 = dma.hbm_to_vmem [thread:$0]  %s148, 64, %s150, %s139, 16, 16, 1
        $region24: #{tpu_custom_call.1} parent=15 // pred_fallthru
          _
      $region16: #{tpu_custom_call.1} parent=5 // pred_fallthru
        _
      %p156 = scmp.le.s32.totalorder 1, %s17
      %p157 = scmp.lt.s32.totalorder %s17, 3
      %p158 = pnand %p156, %p157
      %p159 = pneg %p158
      // Predicated region
      $region25: #{tpu_custom_call.1} parent=5 // pred_check
        _
      $region26: #{tpu_custom_call.1} parent=5 // pred_check_branch
        %161 = sbr.rel (%p158) target = $region28
      $region27: #{tpu_custom_call.1} parent=5 // pred_region
        %s162 = ssub.s32 %s17, 1
        %s163 = sand.u32 %s30, 1
        %s164 = scalar_lea.sflag [#allocation3], %s163
        %s165 = sand.u32 %s30, 1
        %s166 = smul.addr %s165, 8
        %s167 = scalar_lea.vmem [#allocation2], %s166
        // Predicated region
        $region29: #{tpu_custom_call.1} parent=27 // pred_check
          %p168 = pneg %p43
        $region30: #{tpu_custom_call.1} parent=27 // pred_check_branch
          %170 = sbr.rel (%p168) target = $region32
        $region31: #{tpu_custom_call.1} parent=27 // pred_region
          %171 = dma.done %s164, 128
        $region32: #{tpu_custom_call.1} parent=27 // pred_fallthru
          _
        %s172 = sand.u32 %s56, 1
        %s173 = scalar_lea.sflag [#allocation6], %s172
        %s174 = sand.u32 %s56, 1
        %s175 = smul.addr %s174, 4
        %s176 = scalar_lea.vmem [#allocation5], %s175
        // Predicated region
        $region33: #{tpu_custom_call.1} parent=27 // pred_check
          %p177 = pneg %p69
        $region34: #{tpu_custom_call.1} parent=27 // pred_check_branch
          %179 = sbr.rel (%p177) target = $region36
        $region35: #{tpu_custom_call.1} parent=27 // pred_region
          %180 = dma.done %s173, 64
        $region36: #{tpu_custom_call.1} parent=27 // pred_fallthru
          _
        %s181 = sand.u32 %s30, 1
        %s182 = scalar_lea.sflag [#allocation3], %s181
        %s183 = sand.u32 %s30, 1
        %s184 = smul.addr %s183, 8
        %s185 = scalar_lea.vmem [#allocation2], %s184
        %p186 = pneg %p43
        %p187 = pneg %p40
        %s188 = sand.u32 %s56, 1
        %s189 = scalar_lea.sflag [#allocation6], %s188
        %s190 = sand.u32 %s56, 1
        %s191 = smul.addr %s190, 4
        %s192 = scalar_lea.vmem [#allocation5], %s191
        %p193 = pneg %p69
        %p194 = pneg %p66
        %p195 = pneg %p95
        %p196 = pneg %p92
        %s197 = sand.u32 %s82, 1
        %s198 = scalar_lea.sflag [#allocation4], %s197
        %s199 = sand.u32 %s82, 1
        %s200 = smul.addr %s199, 8
        %s201 = scalar_lea.vmem [#allocation7], %s200
        %s202 = smul.u32 4, %s22
        %s203 = smul.u32 4, %s22
        %s204 = smul.u32 4, %s22
        %v205 = vld [vmem:[%s167] sm:$0x3]
        %v206 = vld [vmem:[%s167 + $0x2] sm:$0x3]
        %v207 = vld [vmem:[%s167 + $0x4] sm:$0x3]
        %v208 = vld [vmem:[%s167 + $0x6] sm:$0x3]
        %v209 = vld [vmem:[%s176] sm:$0x1]
        %v210 = vld [vmem:[%s176 + $0x1] sm:$0x1]
        %v211 = vld [vmem:[%s176 + $0x2] sm:$0x1]
        %v212 = vld [vmem:[%s176 + $0x3] sm:$0x1]
        %v217 = vlaneseq
        %v218 = vshrl.u32 %v217, 7
        %v219 = vsub.s32 0, %v218
        %v220 = vrot.slane %v209, %v219
        %v221 = vlaneseq
        %v222 = vshrl.u32 %v221, 7
        %v223 = vsub.s32 0, %v222
        %v224 = vrot.slane %v210, %v223
        %v225 = vlaneseq
        %v226 = vshrl.u32 %v225, 7
        %v227 = vsub.s32 0, %v226
        %v228 = vrot.slane %v211, %v227
        %v229 = vlaneseq
        %v230 = vshrl.u32 %v229, 7
        %v231 = vsub.s32 0, %v230
        %v232 = vrot.slane %v212, %v231
        %v237 = vadd.f32 %v205, %v220
        %v238 = vadd.f32 %v206, %v224
        %v239 = vadd.f32 %v207, %v228
        %v240 = vadd.f32 %v208, %v232
        %vm241 = vcmask 254976
        %242 = vst.msk [vmem:[%s201] sm:$0x3] %vm241, %v237
        %243 = vst.msk [vmem:[%s201 + $0x2] sm:$0x3] %vm241, %v238
        %244 = vst.msk [vmem:[%s201 + $0x4] sm:$0x3] %vm241, %v239
        %245 = vst.msk [vmem:[%s201 + $0x6] sm:$0x3] %vm241, %v240
        %s246 = sand.u32 %s82, 1
        %s247 = scalar_lea.sflag [#allocation4], %s246
        %s248 = sand.u32 %s82, 1
        %s249 = smul.addr %s248, 8
        %s250 = scalar_lea.vmem [#allocation7], %s249
        // Predicated region
        $region37: #{tpu_custom_call.1} parent=27 // pred_check
          %p251 = pneg %p92
        $region38: #{tpu_custom_call.1} parent=27 // pred_check_branch
          %253 = sbr.rel (%p251) target = $region40
        $region39: #{tpu_custom_call.1} parent=27 // pred_region
          %s254 = smul.u32 4, %s22
          %s256 = ssub.s32 128, 128
          %257 = vsyncadd %s247, %s256
          %s258 = smul.addr %s254, 32
          %s259 = scalar_lea.hbm %s2, %s258
          %s260 = sshll.u32 %s250, 4
          %s261 = int_to_ptr.vmem [resolvable:$true] %s260
          %266 = dma.vmem_to_hbm [thread:$0]  %s261, 128, %s259, %s247, 32, 32, 2
        $region40: #{tpu_custom_call.1} parent=27 // pred_fallthru
          _
      $region28: #{tpu_custom_call.1} parent=5 // pred_fallthru
        _
      %p267 = scmp.le.s32.totalorder 2, %s17
      // Predicated region
      $region41: #{tpu_custom_call.1} parent=5 // pred_check
        %p268 = pneg %p267
      $region42: #{tpu_custom_call.1} parent=5 // pred_check_branch
        %270 = sbr.rel (%p268) target = $region44
      $region43: #{tpu_custom_call.1} parent=5 // pred_region
        %s271 = ssub.s32 %s17, 2
        // Predicated region
        $region45: #{tpu_custom_call.1} parent=43 // pred_check
          %p272 = pneg %p98
        $region46: #{tpu_custom_call.1} parent=43 // pred_check_branch
          %274 = sbr.rel (%p272) target = $region48
        $region47: #{tpu_custom_call.1} parent=43 // pred_region
          %s275 = sand.u32 %s83, 1
          %s276 = scalar_lea.sflag [#allocation4], %s275
          %s277 = sand.u32 %s83, 1
          %s278 = smul.addr %s277, 8
          %s279 = scalar_lea.vmem [#allocation7], %s278
          %280 = dma.done %s276, 128
        $region48: #{tpu_custom_call.1} parent=43 // pred_fallthru
          _
      $region44: #{tpu_custom_call.1} parent=5 // pred_fallthru
        _
    $region6: #{tpu_custom_call.1} parent=1 // loop_footer
      %s21 = sadd.s32 1, %s17
    $region7: #{tpu_custom_call.1} parent=1 // loop_footer_branch
      %16 = sbr.rel target = $region3
    $region8: #{tpu_custom_call.1} parent=1 // loop_exit
      _
    %281 = vsyncpa [#allocation3], 1
    %s282 = scalar_lea.sflag [#allocation3], 1
    %283 = vsyncpa %s282, 1
    %284 = vsyncpa [#allocation6], 1
    %s285 = scalar_lea.sflag [#allocation6], 1
    %286 = vsyncpa %s285, 1
    %287 = vsyncpa [#allocation4], 1
    %s288 = scalar_lea.sflag [#allocation4], 1
    %289 = vsyncpa %s288, 1

</llo_original>
